<compile_context>
chip_gen: v5e
topology: v5e:2x2
jax: 0.10.0
libtpu: 0.0.40
codegen_flags: <defaults>
</compile_context>

<pallas_src>
import functools

import jax
import jax.numpy as jnp
from jax.experimental import pallas as pl
from jax.experimental.pallas import tpu as pltpu

# ----------------------------- config ---------------------------------------
N_USERS = 8
N_ITEMS = 8
LATENT_DIM = 32
N_LAYERS = 2
ALPHA = 0.7
R = 0.4
N_NODES = N_USERS + N_ITEMS                         # N = 16
LANE = 128
D_PAD = ((LATENT_DIM + LANE - 1) // LANE) * LANE    # 32 -> 128 (lane-dense)


# ----------------------------- kernel ---------------------------------------
def mogcl_fwd_kernel(adj_ref, ego_ref, mean_ref, fil_ref, *,
                     split, n_layers, alpha):
    """Single grid step computes the whole fused forward pass.

    Inputs (VMEM):
      adj_ref  : (2N, 2N) bf16  block-diag [A_acc, 0; 0, A_nacc]
      ego_ref  : (2N, DP) f32   row-stacked, lane-padded [ego; ego]
    Outputs (VMEM, lane-dense, DP = 128):
      mean_ref : (2N, DP) f32   rows [:N] = acc layer-mean, rows [N:] = nacc
      fil_ref  : (N,  DP) f32   alpha * acc_mean + (1 - alpha) * nacc_mean
    """
    adj_bf = adj_ref[...]                          # bf16 (2N, 2N)
    ego = ego_ref[...]                             # f32  (2N, DP) — layer-0 term
    run_sum = ego                                  # f32 accumulation of layers
    cur_bf = ego.astype(jnp.bfloat16)
    # n_layers is a small static constant -> unrolled bf16 MXU matmul chain,
    # one matmul per layer covers BOTH propagation chains (block-diag fusion).
    for _ in range(n_layers):
        nxt = jnp.dot(adj_bf, cur_bf, preferred_element_type=jnp.float32)
        run_sum = run_sum + nxt
        cur_bf = nxt.astype(jnp.bfloat16)

    mean = run_sum * (1.0 / float(n_layers + 1))   # f32 (2N, DP)
    mean_ref[...] = mean

    acc_mean = mean[:split, :]                     # sublane-aligned (N = 16)
    nacc_mean = mean[split:, :]
    fil_ref[...] = alpha * acc_mean + (1.0 - alpha) * nacc_mean


# ----------------------------- wrapper ---------------------------------------
@jax.jit
def mogcl_forward(adj_acc, adj_nacc, ego_emb):
    n, d = ego_emb.shape
    two_n = 2 * n

    # Block-diagonal adjacency in bf16: one MXU matmul per layer handles both
    # the acc and nacc chains.
    adj_blk = jnp.zeros((two_n, two_n), jnp.float32)
    adj_blk = adj_blk.at[:n, :n].set(adj_acc)
    adj_blk = adj_blk.at[n:, n:].set(adj_nacc)
    adj_blk = adj_blk.astype(jnp.bfloat16)

    # Lane-pad the feature dim to 128 and stack the two chains along rows.
    ego_pad = jnp.zeros((n, D_PAD), jnp.float32).at[:, :d].set(ego_emb)
    ego_stack = jnp.concatenate([ego_pad, ego_pad], axis=0)        # (2N, DP)

    kernel = functools.partial(mogcl_fwd_kernel, split=n,
                               n_layers=N_LAYERS, alpha=float(ALPHA))

    mean_out, fil_out = pl.pallas_call(
        kernel,
        out_shape=(jax.ShapeDtypeStruct((two_n, D_PAD), jnp.float32),
                   jax.ShapeDtypeStruct((n, D_PAD), jnp.float32)),
        grid=(1,),
        in_specs=[
            pl.BlockSpec((two_n, two_n), lambda i: (0, 0)),
            pl.BlockSpec((two_n, D_PAD), lambda i: (0, 0)),
        ],
        out_specs=(
            pl.BlockSpec((two_n, D_PAD), lambda i: (0, 0)),
            pl.BlockSpec((n, D_PAD), lambda i: (0, 0)),
        ),
        compiler_params=pltpu.CompilerParams(
            dimension_semantics=("arbitrary",)),
    )(adj_blk, ego_stack)

    # De-pad / split in plain XLA (cheap, keeps kernel outputs lane-dense).
    lightgcn_acc_all = mean_out[:n, :d]
    lightgcn_nacc_all = mean_out[n:, :d]
    user_fil_emb = fil_out[:N_USERS, :d]
    item_fil_emb = fil_out[N_USERS:, :d]
    return lightgcn_acc_all, lightgcn_nacc_all, user_fil_emb, item_fil_emb


# ----------------------- deterministic parameter setup ----------------------
def build_inputs():
    key = jax.random.PRNGKey(0)
    k_u, k_i, k_r = jax.random.split(key, 3)

    # nn.init.normal_(weight, 0, 0.01)
    user_emb = 0.01 * jax.random.normal(k_u, (N_USERS, LATENT_DIM), jnp.float32)
    item_emb = 0.01 * jax.random.normal(k_i, (N_ITEMS, LATENT_DIM), jnp.float32)
    ego_emb = jnp.concatenate([user_emb, item_emb], axis=0)          # (N, D)

    # synthetic interaction matrix (users x items), deterministic
    inter = (jax.random.uniform(k_r, (N_USERS, N_ITEMS)) < 0.3).astype(jnp.float32)

    # dense bipartite adjacency A = [[0, R], [R^T, 0]]
    A = jnp.zeros((N_NODES, N_NODES), jnp.float32)
    A = A.at[:N_USERS, N_USERS:].set(inter)
    A = A.at[N_USERS:, :N_USERS].set(inter.T)

    deg = (A > 0).sum(axis=1).astype(jnp.float32) + 1e-7

    # acc: D^{-1/2} A D^{-1/2}
    d_half = deg ** -0.5
    adj_acc = d_half[:, None] * A * d_half[None, :]

    # nacc: D^{-r} A D^{-(1-r)}
    d_l = deg ** (-R)
    d_r = deg ** (-(1.0 - R))
    adj_nacc = d_l[:, None] * A * d_r[None, :]

    return adj_acc, adj_nacc, ego_emb


# ----------------------------- pure-JAX reference ----------------------------
def reference_forward(adj_acc, adj_nacc, ego, alpha):
    """Mirrors the kernel's numerics (bf16 matmul inputs, f32 accumulation)."""
    def propagate(adj, ego_f32):
        adj_bf = adj.astype(jnp.bfloat16)
        cur = ego_f32
        run = ego_f32
        for _ in range(N_LAYERS):
            nxt = jnp.dot(adj_bf, cur.astype(jnp.bfloat16),
                          preferred_element_type=jnp.float32)
            run = run + nxt
            cur = nxt
        return run * (1.0 / float(N_LAYERS + 1))

    acc_mean = propagate(adj_acc, ego)
    nacc_mean = propagate(adj_nacc, ego)
    fil = alpha * acc_mean + (1.0 - alpha) * nacc_mean
    return acc_mean, nacc_mean, fil[:N_USERS], fil[N_USERS:]


if __name__ == "__main__":
    adj_acc, adj_nacc, ego_emb = build_inputs()

    outs = mogcl_forward(adj_acc, adj_nacc, ego_emb)
    outs = jax.block_until_ready(outs)

    refs = reference_forward(adj_acc, adj_nacc, ego_emb, ALPHA)
    for o, r in zip(outs, refs):
        assert o.shape == r.shape and o.dtype == r.dtype
        assert jnp.allclose(o, r, atol=1e-5, rtol=1e-3), "mismatch vs reference"

    print("KERNEL_OK")
</pallas_src>

<mosaic_0001>
module attributes {stable_mosaic.version = 11 : i64} {
  func.func @mogcl_fwd_kernel(%arg0: i32, %arg1: memref<32x32xbf16, #tpu.memory_space<vmem>>, %arg2: memref<32x128xf32, #tpu.memory_space<vmem>>, %arg3: memref<32x128xf32, #tpu.memory_space<vmem>>, %arg4: memref<16x128xf32, #tpu.memory_space<vmem>>) attributes {dimension_semantics = [#tpu.dimension_semantics<arbitrary>], iteration_bounds = array<i64: 1>, scalar_prefetch = 0 : i64, scratch_operands = 0 : i64, tpu.core_type = #tpu.core_type<tc>, window_params = [{pipeline_mode = #tpu.pipeline_mode<synchronous>, transform_indices = @transform_0, window_bounds = array<i64: 32, 32>}, {pipeline_mode = #tpu.pipeline_mode<synchronous>, transform_indices = @transform_1, window_bounds = array<i64: 32, 128>}, {pipeline_mode = #tpu.pipeline_mode<synchronous>, transform_indices = @transform_2, window_bounds = array<i64: 32, 128>}, {pipeline_mode = #tpu.pipeline_mode<synchronous>, transform_indices = @transform_3, window_bounds = array<i64: 16, 128>}]} {
    %c0 = arith.constant 0 : index
    %c0_0 = arith.constant 0 : index
    %0 = vector.load %arg1[%c0, %c0_0] : memref<32x32xbf16, #tpu.memory_space<vmem>>, vector<32x32xbf16>
    %c0_1 = arith.constant 0 : index
    %c0_2 = arith.constant 0 : index
    %1 = vector.load %arg2[%c0_1, %c0_2] : memref<32x128xf32, #tpu.memory_space<vmem>>, vector<32x128xf32>
    %2 = arith.truncf %1 : vector<32x128xf32> to vector<32x128xbf16>
    %cst = arith.constant dense<0.000000e+00> : vector<32x128xf32>
    %3 = tpu.matmul %0, %2, %cst {dimension_numbers = #tpu.dot_dimension_numbers<[1], [0], [0], [1], [0, 0, 1, 1], [], []>} : vector<32x32xbf16>, vector<32x128xbf16>, vector<32x128xf32> -> vector<32x128xf32>
    %4 = arith.addf %1, %3 : vector<32x128xf32>
    %5 = arith.truncf %3 : vector<32x128xf32> to vector<32x128xbf16>
    %cst_3 = arith.constant dense<0.000000e+00> : vector<32x128xf32>
    %6 = tpu.matmul %0, %5, %cst_3 {dimension_numbers = #tpu.dot_dimension_numbers<[1], [0], [0], [1], [0, 0, 1, 1], [], []>} : vector<32x32xbf16>, vector<32x128xbf16>, vector<32x128xf32> -> vector<32x128xf32>
    %7 = arith.addf %4, %6 : vector<32x128xf32>
    %cst_4 = arith.constant 0.333333343 : f32
    %8 = vector.broadcast %cst_4 : f32 to vector<32x128xf32>
    %9 = arith.mulf %7, %8 : vector<32x128xf32>
    %c0_5 = arith.constant 0 : index
    %c0_6 = arith.constant 0 : index
    %10 = vector.load %arg3[%c0_5, %c0_6] : memref<32x128xf32, #tpu.memory_space<vmem>>, vector<32x128xf32>
    tpu.vector_store %arg3[%c0_5, %c0_6], %9 {strides = array<i32>} : memref<32x128xf32, #tpu.memory_space<vmem>>, vector<32x128xf32>,
    %11 = vector.extract_strided_slice %9 {offsets = [0, 0], sizes = [16, 128], strides = [1, 1]} : vector<32x128xf32> to vector<16x128xf32>
    %12 = vector.extract_strided_slice %9 {offsets = [16, 0], sizes = [16, 128], strides = [1, 1]} : vector<32x128xf32> to vector<16x128xf32>
    %cst_7 = arith.constant 0.699999988 : f32
    %13 = vector.broadcast %cst_7 : f32 to vector<16x128xf32>
    %14 = arith.mulf %13, %11 : vector<16x128xf32>
    %cst_8 = arith.constant 3.000000e-01 : f32
    %15 = vector.broadcast %cst_8 : f32 to vector<16x128xf32>
    %16 = arith.mulf %15, %12 : vector<16x128xf32>
    %17 = arith.addf %14, %16 : vector<16x128xf32>
    %c0_9 = arith.constant 0 : index
    %c0_10 = arith.constant 0 : index
    %18 = vector.load %arg4[%c0_9, %c0_10] : memref<16x128xf32, #tpu.memory_space<vmem>>, vector<16x128xf32>
    tpu.vector_store %arg4[%c0_9, %c0_10], %17 {strides = array<i32>} : memref<16x128xf32, #tpu.memory_space<vmem>>, vector<16x128xf32>,
    return
  }
  func.func @transform_0(%arg0: i32) -> (i32, i32) {
    %c0_i32 = arith.constant 0 : i32
    %c0_i32_0 = arith.constant 0 : i32
    %c0_i32_1 = arith.constant 0 : i32
    return %c0_i32, %c0_i32_0 : i32, i32
  }
  func.func @transform_1(%arg0: i32) -> (i32, i32) {
    %c0_i32 = arith.constant 0 : i32
    %c0_i32_0 = arith.constant 0 : i32
    %c0_i32_1 = arith.constant 0 : i32
    return %c0_i32, %c0_i32_0 : i32, i32
  }
  func.func @transform_2(%arg0: i32) -> (i32, i32) {
    %c0_i32 = arith.constant 0 : i32
    %c0_i32_0 = arith.constant 0 : i32
    %c0_i32_1 = arith.constant 0 : i32
    return %c0_i32, %c0_i32_0 : i32, i32
  }
  func.func @transform_3(%arg0: i32) -> (i32, i32) {
    %c0_i32 = arith.constant 0 : i32
    %c0_i32_0 = arith.constant 0 : i32
    %c0_i32_1 = arith.constant 0 : i32
    return %c0_i32, %c0_i32_0 : i32, i32
  }
}

</mosaic_0001>

<llo_original>
// kernel: mogcl_forward.1
$region0: #{mogcl_forward.1}
  #allocation0 [shape = 'u32[]', space=smem, size = 0x4, offset = 0x4, fixed_abs, tag = 'smem constant byte address 0x4 - core index']
  #allocation1 [shape = 'u32[72,128]{1,0:T(1,128)}', space=vmem, size = 0x9000, scoped, tag = 'internal scratch']
  %s0 = inlined_call_operand.vmem [shape: bf16[32,32], index: 0, kind: input, shape index: {}]
  %s1 = inlined_call_operand.vmem [shape: f32[32,128], index: 1, kind: input, shape index: {}]
  %s2 = inlined_call_operand.vmem [shape: f32[32,128], index: 2, kind: output, shape index: {0}]
  %s3 = inlined_call_operand.vmem [shape: f32[16,128], index: 3, kind: output, shape index: {1}]
  %4 = xla_tuple %s2, %s3
  %s5 = sld [smem:[#allocation0]]
  $region26: #{mogcl_forward.1} parent=0
    _
  %s7 = ssub.s32 1, %s5
  %s8 = scalar_select 0, %s7, %s5
  // Predicated region
  $region2: #{mogcl_forward.1} parent=0 // pred_check
    _
  $region3: #{mogcl_forward.1} parent=0 // pred_check_branch
    %10 = sbr.rel (0) target = $region5
  $region4: #{mogcl_forward.1} parent=0 // pred_region
    _
  $region5: #{mogcl_forward.1} parent=0 // pred_fallthru
    _
  // Predicated region
  $region6: #{mogcl_forward.1} parent=0 // pred_check
    _
  $region7: #{mogcl_forward.1} parent=0 // pred_check_branch
    %12 = sbr.rel (0) target = $region9
  $region8: #{mogcl_forward.1} parent=0 // pred_region
    _
  $region9: #{mogcl_forward.1} parent=0 // pred_fallthru
    _
  %v14 = vld [vmem:[%s0] sm:$0xf]
  %v15 = vld [vmem:[%s0 + $0x4] sm:$0xf]
  %v16 = vld [vmem:[%s0 + $0x8] sm:$0xf]
  %v17 = vld [vmem:[%s0 + $0xc] sm:$0xf]
  %v18 = vld [vmem:[%s1] sm:$0xff]
  %v19 = vld [vmem:[%s1 + $0x8] sm:$0xff]
  %v20 = vld [vmem:[%s1 + $0x10] sm:$0xff]
  %v21 = vld [vmem:[%s1 + $0x18] sm:$0xff]
  %v22 = vpack.c.bf16 %v19, %v18
  %v23 = vpack.c.bf16 %v21, %v20
  %v28 = vunpack.c.l.b16 %v14
  %v29 = vunpack.c.l.b16 %v15
  %v30 = vunpack.c.l.b16 %v16
  %v31 = vunpack.c.l.b16 %v17
  %v32 = vpack.c.b16 %v29, %v28
  %v33 = vpack.c.b16 %v31, %v30
  %vm34 = vcmask 261120
  %v36 = vsel %vm34, %v32, 0
  %v39 = vsel %vm34, %v33, 0
  %41 = vmatpush.bf16.msra.mxu0 0
  %42 = vmatpush.bf16.msra.mxu0 0
  %43 = vmatpush.bf16.msra.mxu0 0
  %44 = vmatpush.bf16.msra.mxu0 0
  %45 = vmatpush.bf16.msra.mxu0 0
  %46 = vmatpush.bf16.msra.mxu0 0
  %47 = vmatpush.bf16.msra.mxu0 %v23
  %48 = vmatpush.bf16.msra.mxu0 %v22
  %49 = vmatmul.bf16.gmra.mxu0 %v36
  %v50 = vpop.f32.mrf.mxu0
  %v51 = vadd.f32 0.0, %v50
  %v52 = vpop.f32.mrf.mxu0
  %v53 = vadd.f32 0.0, %v52
  %54 = vmatmul.bf16.gmra.mxu0 %v39
  %v55 = vpop.f32.mrf.mxu0
  %v56 = vadd.f32 0.0, %v55
  %v57 = vpop.f32.mrf.mxu0
  %v58 = vadd.f32 0.0, %v57
  %59 = vdwg.mxu0
  %v60 = vadd.f32 %v18, %v51
  %v61 = vadd.f32 %v19, %v53
  %v62 = vadd.f32 %v20, %v56
  %v63 = vadd.f32 %v21, %v58
  %v64 = vpack.c.bf16 %v53, %v51
  %v65 = vpack.c.bf16 %v58, %v56
  %66 = vmatpush.bf16.msra.mxu0 0
  %67 = vmatpush.bf16.msra.mxu0 0
  %68 = vmatpush.bf16.msra.mxu0 0
  %69 = vmatpush.bf16.msra.mxu0 0
  %70 = vmatpush.bf16.msra.mxu0 0
  %71 = vmatpush.bf16.msra.mxu0 0
  %72 = vmatpush.bf16.msra.mxu0 %v65
  %73 = vmatpush.bf16.msra.mxu0 %v64
  %74 = vmatmul.bf16.gmra.mxu0 %v36
  %v75 = vpop.f32.mrf.mxu0
  %v76 = vadd.f32 0.0, %v75
  %v77 = vpop.f32.mrf.mxu0
  %v78 = vadd.f32 0.0, %v77
  %79 = vmatmul.bf16.gmra.mxu0 %v39
  %v80 = vpop.f32.mrf.mxu0
  %v81 = vadd.f32 0.0, %v80
  %v82 = vpop.f32.mrf.mxu0
  %v83 = vadd.f32 0.0, %v82
  %84 = vdwg.mxu0
  %v85 = vadd.f32 %v60, %v76
  %v86 = vadd.f32 %v61, %v78
  %v87 = vadd.f32 %v62, %v81
  %v88 = vadd.f32 %v63, %v83
  %v89 = vmul.f32 %v85, 0.33333334
  %v90 = vmul.f32 %v86, 0.33333334
  %v91 = vmul.f32 %v87, 0.33333334
  %v92 = vmul.f32 %v88, 0.33333334
  %93 = vst [vmem:[%s2] sm:$0xff] %v89
  %94 = vst [vmem:[%s2 + $0x8] sm:$0xff] %v90
  %95 = vst [vmem:[%s2 + $0x10] sm:$0xff] %v91
  %96 = vst [vmem:[%s2 + $0x18] sm:$0xff] %v92
  %v97 = vmul.f32 %v89, 0.7
  %v98 = vmul.f32 %v90, 0.7
  %v99 = vmul.f32 %v91, 0.3
  %v100 = vmul.f32 %v92, 0.3
  %v101 = vadd.f32 %v97, %v99
  %v102 = vadd.f32 %v98, %v100
  %103 = vst [vmem:[%s3] sm:$0xff] %v101
  %104 = vst [vmem:[%s3 + $0x8] sm:$0xff] %v102
  // Predicated region
  $region10: #{mogcl_forward.1} parent=0 // pred_check
    _
  $region11: #{mogcl_forward.1} parent=0 // pred_check_branch
    %106 = sbr.rel (0) target = $region13
  $region12: #{mogcl_forward.1} parent=0 // pred_region
    _
  $region13: #{mogcl_forward.1} parent=0 // pred_fallthru
    _
  // Predicated region
  $region14: #{mogcl_forward.1} parent=0 // pred_check
    _
  $region15: #{mogcl_forward.1} parent=0 // pred_check_branch
    %108 = sbr.rel (0) target = $region17
  $region16: #{mogcl_forward.1} parent=0 // pred_region
    _
  $region17: #{mogcl_forward.1} parent=0 // pred_fallthru
    _
  // Predicated region
  $region18: #{mogcl_forward.1} parent=0 // pred_check
    _
  $region19: #{mogcl_forward.1} parent=0 // pred_check_branch
    %110 = sbr.rel (0) target = $region21
  $region20: #{mogcl_forward.1} parent=0 // pred_region
    _
  $region21: #{mogcl_forward.1} parent=0 // pred_fallthru
    _
  // Predicated region
  $region22: #{mogcl_forward.1} parent=0 // pred_check
    _
  $region23: #{mogcl_forward.1} parent=0 // pred_check_branch
    %112 = sbr.rel (0) target = $region25
  $region24: #{mogcl_forward.1} parent=0 // pred_region
    _
  $region25: #{mogcl_forward.1} parent=0 // pred_fallthru
    _

</llo_original>
